<compile_context>
chip_gen: v7x
topology: tpu7x:2x2x1
jax: 0.10.0
libtpu: 0.0.40
codegen_flags: <defaults>
</compile_context>

<pallas_src>
import functools

import jax
import jax.numpy as jnp
from jax.experimental import pallas as pl
from jax.experimental.pallas import tpu as pltpu


# ----------------------------- OHEM (plain JAX glue) -----------------------------

def _ohem_single(score, gt_score, training_mask):
    """score/gt_score/training_mask: (H, W) float32 -> (H, W) bfloat16 mask.

    Single-sort formulation: both case-A (no positives) and case-B thresholds are
    read from one descending sort of a per-case key array. Matches the torch spec,
    including the negative-index wrap when neg_num // 2 == 0.
    """
    H, W = score.shape
    hw = H * W

    pos = gt_score > 0.5
    pos_num = jnp.sum(pos) - jnp.sum(pos & (training_mask <= 0.5))
    neg = gt_score < 0.5
    neg_num_all = jnp.sum(neg)

    flat_score = score.reshape(-1)
    use_case_a = pos_num == 0

    # Case A sorts all scores; case B sorts only negative-gt scores (others -> -inf,
    # which land at the tail of the descending sort and are never indexed).
    key = jnp.where(use_case_a,
                    flat_score,
                    jnp.where(neg.reshape(-1), flat_score, -jnp.inf))
    sorted_desc = -jnp.sort(-key)   # descending

    # Case A index: (neg_num // 2) - 1 with torch negative-index wrap to the last element.
    neg_a = neg_num_all // 2
    idx_a = jnp.where(neg_a - 1 < 0, hw - 1, neg_a - 1)
    # Case B index: min(3 * pos_num, neg_num) - 1.
    neg_b = jnp.minimum(pos_num * 3, neg_num_all)
    idx_b = jnp.clip(neg_b - 1, 0, hw - 1)

    idx = jnp.where(use_case_a, jnp.clip(idx_a, 0, hw - 1), idx_b)
    thr = sorted_desc[idx]

    mask_a = (score >= thr).astype(jnp.float32)
    mask_b1 = (((score >= thr) | (gt_score > 0.5)) &
               (training_mask > 0.5)).astype(jnp.float32)
    mask_b = jnp.where(neg_b == 0, training_mask, mask_b1)

    # bf16 is exact for {0,1}; only the rare neg_b==0 branch returns training_mask,
    # which is {0,1} in EAST (a soft mask would lose precision here).
    return jnp.where(use_case_a, mask_a, mask_b).astype(jnp.bfloat16)


def ohem_batch(y_true_cls, y_pred_cls, training_mask):
    """Inputs (B,1,H,W); returns ohem masks (B,1,H,W) bfloat16."""
    masks = jax.vmap(_ohem_single)(
        y_pred_cls[:, 0], y_true_cls[:, 0], training_mask[:, 0]
    )
    return masks[:, None, :, :]


# ----------------------------- Pallas kernel -------------------------------------

def _loss_sums_kernel(yt_ref, yp_ref, tm_ref, om_ref, gt_ref, pr_ref, out_ref,
                      acc_ref, *, r_valid, apply_tail_mask):
    # grid = (B, chunks); the (32,128) VMEM scratch accumulates partial sums across the
    # whole grid and is stored to the lane-dense output exactly once at the last step.
    b = pl.program_id(0)
    c = pl.program_id(1)

    @pl.when((b == 0) & (c == 0))
    def _init():
        acc_ref[...] = jnp.zeros_like(acc_ref)

    rows, lane = yt_ref.shape[1], yt_ref.shape[2]
    n8 = rows // 8

    def fold(x):
        # (rows, lane) f32 -> (8, lane) partial sum; pure VPU adds (no cross-lane reduce).
        return jnp.sum(x.reshape(n8, 8, lane), axis=0)

    if apply_tail_mask:
        # Last chunk may over-run the pixel axis (OOB garbage rows): select 0 for invalid
        # rows BEFORE accumulation so garbage (and any NaN from log/cos on garbage) never
        # reaches the accumulator. jnp.where is a select, so NaN does not propagate.
        row_idx = jax.lax.broadcasted_iota(jnp.int32, (rows, lane), 0)
        valid = row_idx < (r_valid - c * rows)
        mask = lambda x: jnp.where(valid, x, 0.0)
    else:
        mask = lambda x: x

    yt = yt_ref[0]                         # caller's f32 planes stream as-is (no casts)
    yp = yp_ref[0]
    tm = tm_ref[0]
    om = om_ref[0].astype(jnp.float32)     # fresh OHEM mask ships as bf16 ({0,1} exact)

    # ---- dice partial sums (with ohem mask) ----
    yt_om = yt * om
    acc_ref[0:8, :] += fold(mask(yt_om * yp))    # intersection
    acc_ref[8:16, :] += fold(mask(yt_om))        # sum(y_true * ohem)
    acc_ref[16:24, :] += fold(mask(yp * om))     # sum(y_pred * ohem)

    # ---- geometry (IoU + angle) loss ----
    d1g = gt_ref[0, 0]
    d2g = gt_ref[0, 1]
    d3g = gt_ref[0, 2]
    d4g = gt_ref[0, 3]
    thg = gt_ref[0, 4]

    d1p = pr_ref[0, 0]
    d2p = pr_ref[0, 1]
    d3p = pr_ref[0, 2]
    d4p = pr_ref[0, 3]
    thp = pr_ref[0, 4]

    area_gt = (d1g + d3g) * (d2g + d4g)
    area_pred = (d1p + d3p) * (d2p + d4p)
    w_union = jnp.minimum(d2g, d2p) + jnp.minimum(d4g, d4p)
    h_union = jnp.minimum(d1g, d1p) + jnp.minimum(d3g, d3p)
    area_intersect = w_union * h_union
    area_union = area_gt + area_pred - area_intersect
    # -log((i+1)/(u+1)) == log(u+1) - log(i+1): drops the EUP divide.
    l_aabb = jnp.log(area_union + 1.0) - jnp.log(area_intersect + 1.0)
    l_theta = 1.0 - jnp.cos(thp - thg)
    l_g = l_aabb + 20.0 * l_theta
    acc_ref[24:32, :] += fold(mask(l_g * (yt * tm)))

    # Single lane-dense (32,128) output store at the very end of the grid.
    @pl.when((b == pl.num_programs(0) - 1) & (c == pl.num_programs(1) - 1))
    def _finalize():
        out_ref[...] = acc_ref[...]


def _round_up(x, m):
    return (x + m - 1) // m * m


def loss_func(y_true_cls, y_pred_cls, y_true_geo, y_pred_geo, training_mask):
    B, _, H, W = y_true_cls.shape
    HW = H * W

    ohem = ohem_batch(y_true_cls, y_pred_cls, training_mask)   # (B,1,H,W) bf16

    LANE = 128
    SUBL = 8
    TARGET_ROWS = 1024          # 128K px / step: ~6.75 MiB in, ~13.5 MiB double-buffered

    # Lane-dense layout: (B, R, 128). For typical EAST shapes (H, W multiples of 32)
    # HW % 1024 == 0 and the reshape below is a free bitcast (no pad, no copy).
    hw_aligned = _round_up(HW, LANE * SUBL)
    R = hw_aligned // LANE                  # multiple of 8
    rows = min(R, TARGET_ROWS)              # block sublane count: full-extent or 1024
    n_chunks = -(-R // rows)
    apply_tail_mask = (R % rows) != 0       # last chunk over-runs -> mask in kernel

    def flat_cls(x):
        x = x.reshape(B, HW)
        if hw_aligned != HW:                # rare fallback; zero pad is numerically safe
            x = jnp.pad(x, ((0, 0), (0, hw_aligned - HW)))
        return x.reshape(B, R, LANE)

    def flat_geo(x):
        x = x.reshape(B, 5, HW)
        if hw_aligned != HW:
            x = jnp.pad(x, ((0, 0), (0, 0), (0, hw_aligned - HW)))
        return x.reshape(B, 5, R, LANE)

    # No dtype casts of caller inputs (a wrapper cast would ADD HBM traffic); only the
    # freshly computed OHEM mask travels as bf16.
    yt = flat_cls(y_true_cls)
    yp = flat_cls(y_pred_cls)
    tm = flat_cls(training_mask)
    om = flat_cls(ohem)
    gt = flat_geo(y_true_geo)
    pr = flat_geo(y_pred_geo)

    cls_map = lambda b, c: (b, c, 0)
    geo_map = lambda b, c: (b, 0, c, 0)

    kernel = functools.partial(_loss_sums_kernel, r_valid=R,
                               apply_tail_mask=apply_tail_mask)

    sums = pl.pallas_call(
        kernel,
        out_shape=jax.ShapeDtypeStruct((32, 128), jnp.float32),
        grid_spec=pltpu.PrefetchScalarGridSpec(
            num_scalar_prefetch=0,
            grid=(B, n_chunks),
            in_specs=[
                pl.BlockSpec((1, rows, LANE), cls_map),      # y_true_cls    (f32)
                pl.BlockSpec((1, rows, LANE), cls_map),      # y_pred_cls    (f32)
                pl.BlockSpec((1, rows, LANE), cls_map),      # training_mask (f32)
                pl.BlockSpec((1, rows, LANE), cls_map),      # ohem mask     (bf16)
                pl.BlockSpec((1, 5, rows, LANE), geo_map),   # y_true_geo    (f32)
                pl.BlockSpec((1, 5, rows, LANE), geo_map),   # y_pred_geo    (f32)
            ],
            out_specs=pl.BlockSpec((32, 128), lambda b, c: (0, 0)),
            scratch_shapes=[pltpu.VMEM((32, 128), jnp.float32)],
        ),
        compiler_params=pltpu.CompilerParams(
            dimension_semantics=("arbitrary", "arbitrary"),
            vmem_limit_bytes=32 * 1024 * 1024),
    )(yt, yp, tm, om, gt, pr)

    # (32,128) -> 4 scalars: [inter, sum(yt*om), sum(yp*om), geo_sum]
    totals = jnp.sum(sums.reshape(4, 8, LANE), axis=(1, 2))
    inter, s_t, s_p, geo_sum = totals[0], totals[1], totals[2], totals[3]

    eps = 1e-5
    classification_loss = (1.0 - 2.0 * inter / (s_t + s_p + eps)) * 0.01
    geo_mean = geo_sum / (B * 1 * H * W)   # mean over the ORIGINAL (unpadded) pixel count
    return geo_mean + classification_loss


# ----------------------------- pure-JAX reference --------------------------------

def _ref_loss(y_true_cls, y_pred_cls, y_true_geo, y_pred_geo, training_mask):
    ohem = ohem_batch(y_true_cls, y_pred_cls, training_mask).astype(jnp.float32)
    eps = 1e-5
    inter = jnp.sum(y_true_cls * y_pred_cls * ohem)
    union = jnp.sum(y_true_cls * ohem) + jnp.sum(y_pred_cls * ohem) + eps
    cls = (1.0 - 2.0 * inter / union) * 0.01

    d1g, d2g, d3g, d4g, thg = jnp.split(y_true_geo, 5, axis=1)
    d1p, d2p, d3p, d4p, thp = jnp.split(y_pred_geo, 5, axis=1)
    area_gt = (d1g + d3g) * (d2g + d4g)
    area_pred = (d1p + d3p) * (d2p + d4p)
    w_union = jnp.minimum(d2g, d2p) + jnp.minimum(d4g, d4p)
    h_union = jnp.minimum(d1g, d1p) + jnp.minimum(d3g, d3p)
    area_intersect = w_union * h_union
    area_union = area_gt + area_pred - area_intersect
    l_aabb = -jnp.log((area_intersect + 1.0) / (area_union + 1.0))
    l_theta = 1.0 - jnp.cos(thp - thg)
    l_g = l_aabb + 20.0 * l_theta
    return jnp.mean(l_g * y_true_cls * training_mask) + cls


# ----------------------------- main -----------------------------------------------

if __name__ == "__main__":
    B, H, W = 2, 16, 16
    key = jax.random.PRNGKey(0)
    k1, k2, k3, k4, k5 = jax.random.split(key, 5)

    y_true_cls = jax.random.bernoulli(k1, 0.3, (B, 1, H, W)).astype(jnp.float32)
    y_pred_cls = jax.random.uniform(k2, (B, 1, H, W), jnp.float32)
    training_mask = jax.random.bernoulli(k3, 0.9, (B, 1, H, W)).astype(jnp.float32)
    y_true_geo = jax.random.uniform(k4, (B, 5, H, W), jnp.float32, 0.0, 10.0)
    y_pred_geo = jax.random.uniform(k5, (B, 5, H, W), jnp.float32, 0.0, 10.0)

    loss = jax.jit(loss_func)(y_true_cls, y_pred_cls, y_true_geo, y_pred_geo,
                              training_mask)
    loss = jax.block_until_ready(loss)

    ref = jax.block_until_ready(
        _ref_loss(y_true_cls, y_pred_cls, y_true_geo, y_pred_geo, training_mask))

    assert bool(jnp.isfinite(loss)), loss
    assert float(jnp.abs(loss - ref)) < 5e-4 * max(1.0, float(jnp.abs(ref))), (loss, ref)
    print("KERNEL_OK")
</pallas_src>

<mosaic_0001>
module attributes {stable_mosaic.version = 11 : i64} {
  func.func @_loss_sums_kernel(%arg0: i32, %arg1: i32, %arg2: memref<1x8x128xf32, #tpu.memory_space<vmem>>, %arg3: memref<1x8x128xf32, #tpu.memory_space<vmem>>, %arg4: memref<1x8x128xf32, #tpu.memory_space<vmem>>, %arg5: memref<1x8x128xbf16, #tpu.memory_space<vmem>>, %arg6: memref<1x5x8x128xf32, #tpu.memory_space<vmem>>, %arg7: memref<1x5x8x128xf32, #tpu.memory_space<vmem>>, %arg8: memref<32x128xf32, #tpu.memory_space<vmem>>, %arg9: memref<32x128xf32, #tpu.memory_space<vmem>>) attributes {dimension_semantics = [#tpu.dimension_semantics<arbitrary>, #tpu.dimension_semantics<arbitrary>], iteration_bounds = array<i64: 2, 1>, scalar_prefetch = 0 : i64, scratch_operands = 1 : i64, tpu.core_type = #tpu.core_type<tc>, window_params = [{transform_indices = @transform_0, window_bounds = array<i64: 1, 8, 128>}, {transform_indices = @transform_1, window_bounds = array<i64: 1, 8, 128>}, {transform_indices = @transform_2, window_bounds = array<i64: 1, 8, 128>}, {transform_indices = @transform_3, window_bounds = array<i64: 1, 8, 128>}, {transform_indices = @transform_4, window_bounds = array<i64: 1, 5, 8, 128>}, {transform_indices = @transform_5, window_bounds = array<i64: 1, 5, 8, 128>}, {pipeline_mode = #tpu.pipeline_mode<synchronous>, transform_indices = @transform_6, window_bounds = array<i64: 32, 128>}]} {
    %c0_i32 = arith.constant 0 : i32
    %0 = arith.cmpi eq, %arg0, %c0_i32 : i32
    %c0_i32_0 = arith.constant 0 : i32
    %1 = arith.cmpi eq, %arg1, %c0_i32_0 : i32
    %2 = arith.andi %0, %1 : i1
    %3 = arith.extui %2 : i1 to i32
    %c0_i32_1 = arith.constant 0 : i32
    %4 = arith.cmpi ne, %3, %c0_i32_1 : i32
    scf.if %4 {
      %cst_71 = arith.constant 0.000000e+00 : f32
      %93 = vector.broadcast %cst_71 : f32 to vector<32x128xf32>
      %c0_72 = arith.constant 0 : index
      %c0_73 = arith.constant 0 : index
      %94 = vector.load %arg9[%c0_72, %c0_73] : memref<32x128xf32, #tpu.memory_space<vmem>>, vector<32x128xf32>
      tpu.vector_store %arg9[%c0_72, %c0_73], %93 {strides = array<i32>} : memref<32x128xf32, #tpu.memory_space<vmem>>, vector<32x128xf32>,
    } else {
    }
    %c0 = arith.constant 0 : index
    %c0_2 = arith.constant 0 : index
    %c0_3 = arith.constant 0 : index
    %5 = vector.load %arg2[%c0, %c0_2, %c0_3] : memref<1x8x128xf32, #tpu.memory_space<vmem>>, vector<1x8x128xf32>
    %6 = vector.shape_cast %5 : vector<1x8x128xf32> to vector<8x128xf32>
    %c0_4 = arith.constant 0 : index
    %c0_5 = arith.constant 0 : index
    %c0_6 = arith.constant 0 : index
    %7 = vector.load %arg3[%c0_4, %c0_5, %c0_6] : memref<1x8x128xf32, #tpu.memory_space<vmem>>, vector<1x8x128xf32>
    %8 = vector.shape_cast %7 : vector<1x8x128xf32> to vector<8x128xf32>
    %c0_7 = arith.constant 0 : index
    %c0_8 = arith.constant 0 : index
    %c0_9 = arith.constant 0 : index
    %9 = vector.load %arg4[%c0_7, %c0_8, %c0_9] : memref<1x8x128xf32, #tpu.memory_space<vmem>>, vector<1x8x128xf32>
    %10 = vector.shape_cast %9 : vector<1x8x128xf32> to vector<8x128xf32>
    %c0_10 = arith.constant 0 : index
    %c0_11 = arith.constant 0 : index
    %c0_12 = arith.constant 0 : index
    %11 = vector.load %arg5[%c0_10, %c0_11, %c0_12] : memref<1x8x128xbf16, #tpu.memory_space<vmem>>, vector<1x8x128xbf16>
    %12 = vector.shape_cast %11 : vector<1x8x128xbf16> to vector<8x128xbf16>
    %13 = arith.extf %12 : vector<8x128xbf16> to vector<8x128xf32>
    %14 = arith.mulf %6, %13 : vector<8x128xf32>
    %c0_13 = arith.constant 0 : index
    %c0_14 = arith.constant 0 : index
    %15 = vector.load %arg9[%c0_13, %c0_14] : memref<32x128xf32, #tpu.memory_space<vmem>>, vector<8x128xf32>
    %16 = arith.mulf %14, %8 : vector<8x128xf32>
    %17 = vector.shape_cast %16 : vector<8x128xf32> to vector<1x8x128xf32>
    %cst = arith.constant dense<0.000000e+00> : vector<8x128xf32>
    %18 = vector.multi_reduction <add>, %17, %cst [0] : vector<1x8x128xf32> to vector<8x128xf32>
    %19 = arith.addf %15, %18 : vector<8x128xf32>
    %c0_15 = arith.constant 0 : index
    %c0_16 = arith.constant 0 : index
    %20 = vector.load %arg9[%c0_15, %c0_16] : memref<32x128xf32, #tpu.memory_space<vmem>>, vector<8x128xf32>
    tpu.vector_store %arg9[%c0_15, %c0_16], %19 {strides = array<i32>} : memref<32x128xf32, #tpu.memory_space<vmem>>, vector<8x128xf32>,
    %c8 = arith.constant 8 : index
    %c0_17 = arith.constant 0 : index
    %21 = vector.load %arg9[%c8, %c0_17] : memref<32x128xf32, #tpu.memory_space<vmem>>, vector<8x128xf32>
    %22 = vector.shape_cast %14 : vector<8x128xf32> to vector<1x8x128xf32>
    %cst_18 = arith.constant dense<0.000000e+00> : vector<8x128xf32>
    %23 = vector.multi_reduction <add>, %22, %cst_18 [0] : vector<1x8x128xf32> to vector<8x128xf32>
    %24 = arith.addf %21, %23 : vector<8x128xf32>
    %c8_19 = arith.constant 8 : index
    %c0_20 = arith.constant 0 : index
    %25 = vector.load %arg9[%c8_19, %c0_20] : memref<32x128xf32, #tpu.memory_space<vmem>>, vector<8x128xf32>
    tpu.vector_store %arg9[%c8_19, %c0_20], %24 {strides = array<i32>} : memref<32x128xf32, #tpu.memory_space<vmem>>, vector<8x128xf32>,
    %c16 = arith.constant 16 : index
    %c0_21 = arith.constant 0 : index
    %26 = vector.load %arg9[%c16, %c0_21] : memref<32x128xf32, #tpu.memory_space<vmem>>, vector<8x128xf32>
    %27 = arith.mulf %8, %13 : vector<8x128xf32>
    %28 = vector.shape_cast %27 : vector<8x128xf32> to vector<1x8x128xf32>
    %cst_22 = arith.constant dense<0.000000e+00> : vector<8x128xf32>
    %29 = vector.multi_reduction <add>, %28, %cst_22 [0] : vector<1x8x128xf32> to vector<8x128xf32>
    %30 = arith.addf %26, %29 : vector<8x128xf32>
    %c16_23 = arith.constant 16 : index
    %c0_24 = arith.constant 0 : index
    %31 = vector.load %arg9[%c16_23, %c0_24] : memref<32x128xf32, #tpu.memory_space<vmem>>, vector<8x128xf32>
    tpu.vector_store %arg9[%c16_23, %c0_24], %30 {strides = array<i32>} : memref<32x128xf32, #tpu.memory_space<vmem>>, vector<8x128xf32>,
    %c0_25 = arith.constant 0 : index
    %c0_26 = arith.constant 0 : index
    %c0_27 = arith.constant 0 : index
    %c0_28 = arith.constant 0 : index
    %32 = vector.load %arg6[%c0_25, %c0_26, %c0_27, %c0_28] : memref<1x5x8x128xf32, #tpu.memory_space<vmem>>, vector<1x1x8x128xf32>
    %33 = vector.shape_cast %32 : vector<1x1x8x128xf32> to vector<8x128xf32>
    %c0_29 = arith.constant 0 : index
    %c1 = arith.constant 1 : index
    %c0_30 = arith.constant 0 : index
    %c0_31 = arith.constant 0 : index
    %34 = vector.load %arg6[%c0_29, %c1, %c0_30, %c0_31] : memref<1x5x8x128xf32, #tpu.memory_space<vmem>>, vector<1x1x8x128xf32>
    %35 = vector.shape_cast %34 : vector<1x1x8x128xf32> to vector<8x128xf32>
    %c0_32 = arith.constant 0 : index
    %c2 = arith.constant 2 : index
    %c0_33 = arith.constant 0 : index
    %c0_34 = arith.constant 0 : index
    %36 = vector.load %arg6[%c0_32, %c2, %c0_33, %c0_34] : memref<1x5x8x128xf32, #tpu.memory_space<vmem>>, vector<1x1x8x128xf32>
    %37 = vector.shape_cast %36 : vector<1x1x8x128xf32> to vector<8x128xf32>
    %c0_35 = arith.constant 0 : index
    %c3 = arith.constant 3 : index
    %c0_36 = arith.constant 0 : index
    %c0_37 = arith.constant 0 : index
    %38 = vector.load %arg6[%c0_35, %c3, %c0_36, %c0_37] : memref<1x5x8x128xf32, #tpu.memory_space<vmem>>, vector<1x1x8x128xf32>
    %39 = vector.shape_cast %38 : vector<1x1x8x128xf32> to vector<8x128xf32>
    %c0_38 = arith.constant 0 : index
    %c4 = arith.constant 4 : index
    %c0_39 = arith.constant 0 : index
    %c0_40 = arith.constant 0 : index
    %40 = vector.load %arg6[%c0_38, %c4, %c0_39, %c0_40] : memref<1x5x8x128xf32, #tpu.memory_space<vmem>>, vector<1x1x8x128xf32>
    %41 = vector.shape_cast %40 : vector<1x1x8x128xf32> to vector<8x128xf32>
    %c0_41 = arith.constant 0 : index
    %c0_42 = arith.constant 0 : index
    %c0_43 = arith.constant 0 : index
    %c0_44 = arith.constant 0 : index
    %42 = vector.load %arg7[%c0_41, %c0_42, %c0_43, %c0_44] : memref<1x5x8x128xf32, #tpu.memory_space<vmem>>, vector<1x1x8x128xf32>
    %43 = vector.shape_cast %42 : vector<1x1x8x128xf32> to vector<8x128xf32>
    %c0_45 = arith.constant 0 : index
    %c1_46 = arith.constant 1 : index
    %c0_47 = arith.constant 0 : index
    %c0_48 = arith.constant 0 : index
    %44 = vector.load %arg7[%c0_45, %c1_46, %c0_47, %c0_48] : memref<1x5x8x128xf32, #tpu.memory_space<vmem>>, vector<1x1x8x128xf32>
    %45 = vector.shape_cast %44 : vector<1x1x8x128xf32> to vector<8x128xf32>
    %c0_49 = arith.constant 0 : index
    %c2_50 = arith.constant 2 : index
    %c0_51 = arith.constant 0 : index
    %c0_52 = arith.constant 0 : index
    %46 = vector.load %arg7[%c0_49, %c2_50, %c0_51, %c0_52] : memref<1x5x8x128xf32, #tpu.memory_space<vmem>>, vector<1x1x8x128xf32>
    %47 = vector.shape_cast %46 : vector<1x1x8x128xf32> to vector<8x128xf32>
    %c0_53 = arith.constant 0 : index
    %c3_54 = arith.constant 3 : index
    %c0_55 = arith.constant 0 : index
    %c0_56 = arith.constant 0 : index
    %48 = vector.load %arg7[%c0_53, %c3_54, %c0_55, %c0_56] : memref<1x5x8x128xf32, #tpu.memory_space<vmem>>, vector<1x1x8x128xf32>
    %49 = vector.shape_cast %48 : vector<1x1x8x128xf32> to vector<8x128xf32>
    %c0_57 = arith.constant 0 : index
    %c4_58 = arith.constant 4 : index
    %c0_59 = arith.constant 0 : index
    %c0_60 = arith.constant 0 : index
    %50 = vector.load %arg7[%c0_57, %c4_58, %c0_59, %c0_60] : memref<1x5x8x128xf32, #tpu.memory_space<vmem>>, vector<1x1x8x128xf32>
    %51 = vector.shape_cast %50 : vector<1x1x8x128xf32> to vector<8x128xf32>
    %52 = arith.addf %33, %37 : vector<8x128xf32>
    %53 = arith.addf %35, %39 : vector<8x128xf32>
    %54 = arith.mulf %52, %53 : vector<8x128xf32>
    %55 = arith.addf %43, %47 : vector<8x128xf32>
    %56 = arith.addf %45, %49 : vector<8x128xf32>
    %57 = arith.mulf %55, %56 : vector<8x128xf32>
    %58 = arith.minimumf %35, %45 : vector<8x128xf32>
    %59 = arith.minimumf %39, %49 : vector<8x128xf32>
    %60 = arith.addf %58, %59 : vector<8x128xf32>
    %61 = arith.minimumf %33, %43 : vector<8x128xf32>
    %62 = arith.minimumf %37, %47 : vector<8x128xf32>
    %63 = arith.addf %61, %62 : vector<8x128xf32>
    %64 = arith.mulf %60, %63 : vector<8x128xf32>
    %65 = arith.addf %54, %57 : vector<8x128xf32>
    %66 = arith.subf %65, %64 : vector<8x128xf32>
    %cst_61 = arith.constant 1.000000e+00 : f32
    %67 = vector.broadcast %cst_61 : f32 to vector<8x128xf32>
    %68 = arith.addf %66, %67 : vector<8x128xf32>
    %69 = math.log %68 : vector<8x128xf32>
    %cst_62 = arith.constant 1.000000e+00 : f32
    %70 = vector.broadcast %cst_62 : f32 to vector<8x128xf32>
    %71 = arith.addf %64, %70 : vector<8x128xf32>
    %72 = math.log %71 : vector<8x128xf32>
    %73 = arith.subf %69, %72 : vector<8x128xf32>
    %74 = arith.subf %51, %41 : vector<8x128xf32>
    %75 = math.cos %74 : vector<8x128xf32>
    %cst_63 = arith.constant 1.000000e+00 : f32
    %76 = vector.broadcast %cst_63 : f32 to vector<8x128xf32>
    %77 = arith.subf %76, %75 : vector<8x128xf32>
    %cst_64 = arith.constant 2.000000e+01 : f32
    %78 = vector.broadcast %cst_64 : f32 to vector<8x128xf32>
    %79 = arith.mulf %78, %77 : vector<8x128xf32>
    %80 = arith.addf %73, %79 : vector<8x128xf32>
    %c24 = arith.constant 24 : index
    %c0_65 = arith.constant 0 : index
    %81 = vector.load %arg9[%c24, %c0_65] : memref<32x128xf32, #tpu.memory_space<vmem>>, vector<8x128xf32>
    %82 = arith.mulf %6, %10 : vector<8x128xf32>
    %83 = arith.mulf %80, %82 : vector<8x128xf32>
    %84 = vector.shape_cast %83 : vector<8x128xf32> to vector<1x8x128xf32>
    %cst_66 = arith.constant dense<0.000000e+00> : vector<8x128xf32>
    %85 = vector.multi_reduction <add>, %84, %cst_66 [0] : vector<1x8x128xf32> to vector<8x128xf32>
    %86 = arith.addf %81, %85 : vector<8x128xf32>
    %c24_67 = arith.constant 24 : index
    %c0_68 = arith.constant 0 : index
    %87 = vector.load %arg9[%c24_67, %c0_68] : memref<32x128xf32, #tpu.memory_space<vmem>>, vector<8x128xf32>
    tpu.vector_store %arg9[%c24_67, %c0_68], %86 {strides = array<i32>} : memref<32x128xf32, #tpu.memory_space<vmem>>, vector<8x128xf32>,
    %c1_i32 = arith.constant 1 : i32
    %88 = arith.cmpi eq, %arg0, %c1_i32 : i32
    %c0_i32_69 = arith.constant 0 : i32
    %89 = arith.cmpi eq, %arg1, %c0_i32_69 : i32
    %90 = arith.andi %88, %89 : i1
    %91 = arith.extui %90 : i1 to i32
    %c0_i32_70 = arith.constant 0 : i32
    %92 = arith.cmpi ne, %91, %c0_i32_70 : i32
    scf.if %92 {
      %c0_71 = arith.constant 0 : index
      %c0_72 = arith.constant 0 : index
      %93 = vector.load %arg9[%c0_71, %c0_72] : memref<32x128xf32, #tpu.memory_space<vmem>>, vector<32x128xf32>
      %c0_73 = arith.constant 0 : index
      %c0_74 = arith.constant 0 : index
      %94 = vector.load %arg8[%c0_73, %c0_74] : memref<32x128xf32, #tpu.memory_space<vmem>>, vector<32x128xf32>
      tpu.vector_store %arg8[%c0_73, %c0_74], %93 {strides = array<i32>} : memref<32x128xf32, #tpu.memory_space<vmem>>, vector<32x128xf32>,
    } else {
    }
    return
  }
  func.func @transform_0(%arg0: i32, %arg1: i32) -> (i32, i32, i32) {
    %c0_i32 = arith.constant 0 : i32
    %c0_i32_0 = arith.constant 0 : i32
    return %arg0, %arg1, %c0_i32 : i32, i32, i32
  }
  func.func @transform_1(%arg0: i32, %arg1: i32) -> (i32, i32, i32) {
    %c0_i32 = arith.constant 0 : i32
    %c0_i32_0 = arith.constant 0 : i32
    return %arg0, %arg1, %c0_i32 : i32, i32, i32
  }
  func.func @transform_2(%arg0: i32, %arg1: i32) -> (i32, i32, i32) {
    %c0_i32 = arith.constant 0 : i32
    %c0_i32_0 = arith.constant 0 : i32
    return %arg0, %arg1, %c0_i32 : i32, i32, i32
  }
  func.func @transform_3(%arg0: i32, %arg1: i32) -> (i32, i32, i32) {
    %c0_i32 = arith.constant 0 : i32
    %c0_i32_0 = arith.constant 0 : i32
    return %arg0, %arg1, %c0_i32 : i32, i32, i32
  }
  func.func @transform_4(%arg0: i32, %arg1: i32) -> (i32, i32, i32, i32) {
    %c0_i32 = arith.constant 0 : i32
    %c0_i32_0 = arith.constant 0 : i32
    %c0_i32_1 = arith.constant 0 : i32
    return %arg0, %c0_i32, %arg1, %c0_i32_0 : i32, i32, i32, i32
  }
  func.func @transform_5(%arg0: i32, %arg1: i32) -> (i32, i32, i32, i32) {
    %c0_i32 = arith.constant 0 : i32
    %c0_i32_0 = arith.constant 0 : i32
    %c0_i32_1 = arith.constant 0 : i32
    return %arg0, %c0_i32, %arg1, %c0_i32_0 : i32, i32, i32, i32
  }
  func.func @transform_6(%arg0: i32, %arg1: i32) -> (i32, i32) {
    %c0_i32 = arith.constant 0 : i32
    %c0_i32_0 = arith.constant 0 : i32
    %c0_i32_1 = arith.constant 0 : i32
    return %c0_i32, %c0_i32_0 : i32, i32
  }
}

</mosaic_0001>

<llo_original>
// kernel: neg.3
$region0: #{neg.3}
  #allocation0 [shape = 's32[1]{0}', space=sflag, size = 0x4, scoped, tag = 'scoped memory for neg.3']
  %s0 = inlined_call_operand.vmem [shape: f32[2,256], index: 0, kind: input, shape index: {}]
  %s1 = inlined_call_operand.vmem [shape: f32[2,256], index: 1, kind: output, shape index: {}]
  %v2 = vld [vmem:[%s0] sm:$0x3]
  %3 = xla_tuple %v2
  %4 = xla_tuple %3
  %v5 = vxor.u32 %v2, 2147483648
  %6 = xla_tuple %v5
  %7 = vst [vmem:[%s1] sm:$0x3] %v5
  %s8 = scalar_lea.vmem %s0, 2
  %v9 = vld [vmem:[%s8] sm:$0x3]
  %10 = xla_tuple %v9
  %11 = xla_tuple %10
  %v12 = vxor.u32 %v9, 2147483648
  %13 = xla_tuple %v12
  %s14 = scalar_lea.vmem %s1, 2
  %15 = vst [vmem:[%s14] sm:$0x3] %v12

// kernel: loss_func.1
$region0: #{loss_func.1}
  #allocation0 [shape = 'u32[]', space=smem, size = 0x4, offset = 0x4, fixed_abs, tag = 'smem constant byte address 0x4 - core index']
  #allocation1 [shape = 'u32[144,128]{1,0:T(1,128)}', space=vmem, size = 0x12000, scoped, tag = 'internal scratch']
  #allocation2 [shape = 'f32[32,128]{1,0:T(8,128)}', space=vmem, size = 0x4000, scoped, tag = 'scratch operand']
  %s0 = inlined_call_operand.vmem [shape: f32[2,8,128], index: 0, kind: input, shape index: {}]
  %s1 = inlined_call_operand.vmem [shape: f32[2,8,128], index: 1, kind: input, shape index: {}]
  %s2 = inlined_call_operand.vmem [shape: f32[2,8,128], index: 2, kind: input, shape index: {}]
  %s3 = inlined_call_operand.vmem [shape: bf16[2,8,128], index: 3, kind: input, shape index: {}]
  %s4 = inlined_call_operand.vmem [shape: f32[2,5,8,128], index: 4, kind: input, shape index: {}]
  %s5 = inlined_call_operand.vmem [shape: f32[2,5,8,128], index: 5, kind: input, shape index: {}]
  %s6 = inlined_call_operand.vmem [shape: f32[32,128], index: 6, kind: output, shape index: {}]
  %s7 = sld [smem:[#allocation0]]
  $region65: #{loss_func.1} parent=0
    _
  %s9 = ssub.s32 1, %s7
  %s10 = scalar_select 0, %s9, %s7
  loop: start=0, step=1, limit=4
  $region2: #{loss_func.1} parent=0 // loop_pre_header
    _
  $region3: #{loss_func.1} parent=0 // loop_header
    %s12 = sphi 0, %s16
    %p13 = scmp.ge.s32.totalorder %s12, 4
    %s19 = sphi 0, %s31
    %s20 = sphi 0, %s27
    %s21 = sphi 0, %s19
    %s22 = sphi 0, %s20
    %s23 = sphi 0, %s21
    %s24 = sphi 0, %s22
    %s36 = sphi 0, %s38
    %s39 = sphi 0, %s36
    %s40 = sphi 0, %s39
    %s56 = sphi 0, %s40
    %s64 = sphi 0, %s66
    %s67 = sphi 0, %s64
    %s68 = sphi 0, %s67
    %s84 = sphi 0, %s68
    %s92 = sphi 0, %s94
    %s95 = sphi 0, %s92
    %s96 = sphi 0, %s95
    %s112 = sphi 0, %s96
    %s120 = sphi 0, %s122
    %s123 = sphi 0, %s120
    %s124 = sphi 0, %s123
    %s140 = sphi 0, %s124
    %s148 = sphi 0, %s150
    %s151 = sphi 0, %s148
    %s152 = sphi 0, %s151
    %s168 = sphi 0, %s152
    %s176 = sphi 0, %s178
    %s179 = sphi 0, %s176
    %s180 = sphi 0, %s179
    %s196 = sphi 0, %s180
    %s200 = sphi 0, %s200
    %s202 = sphi 0, %s200
    %s203 = sphi 0, %s202
    %s217 = sphi 0, %s203
  $region4: #{loss_func.1} parent=0 // loop_header_branch
    %15 = sbr.rel (%p13) target = $region8
  $region5: #{loss_func.1} parent=0 // loop_body
    %s17 = ssub.s32 %s12, 1
    %s18 = ssub.s32 %s12, 2
    %s25 = sadd.s32 1, %s20
    %p26 = scmp.ge.s32.totalorder %s25, 1
    %s27 = scalar_select %p26, 0, %s25
    %s28 = sadd.s32 1, %s19
    %s29 = scalar_select %p26, %s28, %s19
    %p30 = scmp.ge.s32.totalorder %s29, 2
    %s31 = scalar_select %p30, 0, %s29
    %s32 = ssub.s32 %s19, %s31
    %s33 = ssub.s32 %s20, %s27
    %s34 = sor.u32 %s32, %s33
    %p35 = scmp.eq.s32.totalorder %s34, 0
    %s37 = sadd.s32 %s36, 1
    %s38 = scalar_select %p35, %s36, %s37
    %p41 = pneg %p35
    %p42 = scmp.eq.s32.totalorder %s12, 1
    %p43 = por %p41, %p42
    %p44 = scmp.ne.s32.totalorder %s36, %s39
    %p45 = scmp.eq.s32.totalorder %s12, 0
    %p46 = por %p44, %p45
    %p47 = scmp.ne.s32.totalorder %s36, %s39
    %p48 = scmp.eq.s32.totalorder %s17, 1
    %p49 = por %p47, %p48
    %p50 = scmp.ne.s32.totalorder %s39, %s40
    %p51 = scmp.eq.s32.totalorder %s17, 0
    %p52 = por %p50, %p51
    %p53 = scmp.ne.s32.totalorder %s39, %s40
    %p54 = scmp.eq.s32.totalorder %s18, 1
    %p55 = por %p53, %p54
    %p57 = scmp.ne.s32.totalorder %s40, %s56
    %p58 = scmp.eq.s32.totalorder %s18, 0
    %p59 = por %p57, %p58
    %s60 = ssub.s32 %s19, %s31
    %s61 = ssub.s32 %s20, %s27
    %s62 = sor.u32 %s60, %s61
    %p63 = scmp.eq.s32.totalorder %s62, 0
    %s65 = sadd.s32 %s64, 1
    %s66 = scalar_select %p63, %s64, %s65
    %p69 = pneg %p63
    %p70 = scmp.eq.s32.totalorder %s12, 1
    %p71 = por %p69, %p70
    %p72 = scmp.ne.s32.totalorder %s64, %s67
    %p73 = scmp.eq.s32.totalorder %s12, 0
    %p74 = por %p72, %p73
    %p75 = scmp.ne.s32.totalorder %s64, %s67
    %p76 = scmp.eq.s32.totalorder %s17, 1
    %p77 = por %p75, %p76
    %p78 = scmp.ne.s32.totalorder %s67, %s68
    %p79 = scmp.eq.s32.totalorder %s17, 0
    %p80 = por %p78, %p79
    %p81 = scmp.ne.s32.totalorder %s67, %s68
    %p82 = scmp.eq.s32.totalorder %s18, 1
    %p83 = por %p81, %p82
    %p85 = scmp.ne.s32.totalorder %s68, %s84
    %p86 = scmp.eq.s32.totalorder %s18, 0
    %p87 = por %p85, %p86
    %s88 = ssub.s32 %s19, %s31
    %s89 = ssub.s32 %s20, %s27
    %s90 = sor.u32 %s88, %s89
    %p91 = scmp.eq.s32.totalorder %s90, 0
    %s93 = sadd.s32 %s92, 1
    %s94 = scalar_select %p91, %s92, %s93
    %p97 = pneg %p91
    %p98 = scmp.eq.s32.totalorder %s12, 1
    %p99 = por %p97, %p98
    %p100 = scmp.ne.s32.totalorder %s92, %s95
    %p101 = scmp.eq.s32.totalorder %s12, 0
    %p102 = por %p100, %p101
    %p103 = scmp.ne.s32.totalorder %s92, %s95
    %p104 = scmp.eq.s32.totalorder %s17, 1
    %p105 = por %p103, %p104
    %p106 = scmp.ne.s32.totalorder %s95, %s96
    %p107 = scmp.eq.s32.totalorder %s17, 0
    %p108 = por %p106, %p107
    %p109 = scmp.ne.s32.totalorder %s95, %s96
    %p110 = scmp.eq.s32.totalorder %s18, 1
    %p111 = por %p109, %p110
    %p113 = scmp.ne.s32.totalorder %s96, %s112
    %p114 = scmp.eq.s32.totalorder %s18, 0
    %p115 = por %p113, %p114
    %s116 = ssub.s32 %s19, %s31
    %s117 = ssub.s32 %s20, %s27
    %s118 = sor.u32 %s116, %s117
    %p119 = scmp.eq.s32.totalorder %s118, 0
    %s121 = sadd.s32 %s120, 1
    %s122 = scalar_select %p119, %s120, %s121
    %p125 = pneg %p119
    %p126 = scmp.eq.s32.totalorder %s12, 1
    %p127 = por %p125, %p126
    %p128 = scmp.ne.s32.totalorder %s120, %s123
    %p129 = scmp.eq.s32.totalorder %s12, 0
    %p130 = por %p128, %p129
    %p131 = scmp.ne.s32.totalorder %s120, %s123
    %p132 = scmp.eq.s32.totalorder %s17, 1
    %p133 = por %p131, %p132
    %p134 = scmp.ne.s32.totalorder %s123, %s124
    %p135 = scmp.eq.s32.totalorder %s17, 0
    %p136 = por %p134, %p135
    %p137 = scmp.ne.s32.totalorder %s123, %s124
    %p138 = scmp.eq.s32.totalorder %s18, 1
    %p139 = por %p137, %p138
    %p141 = scmp.ne.s32.totalorder %s124, %s140
    %p142 = scmp.eq.s32.totalorder %s18, 0
    %p143 = por %p141, %p142
    %s144 = ssub.s32 %s19, %s31
    %s145 = ssub.s32 %s20, %s27
    %s146 = sor.u32 %s144, %s145
    %p147 = scmp.eq.s32.totalorder %s146, 0
    %s149 = sadd.s32 %s148, 1
    %s150 = scalar_select %p147, %s148, %s149
    %p153 = pneg %p147
    %p154 = scmp.eq.s32.totalorder %s12, 1
    %p155 = por %p153, %p154
    %p156 = scmp.ne.s32.totalorder %s148, %s151
    %p157 = scmp.eq.s32.totalorder %s12, 0
    %p158 = por %p156, %p157
    %p159 = scmp.ne.s32.totalorder %s148, %s151
    %p160 = scmp.eq.s32.totalorder %s17, 1
    %p161 = por %p159, %p160
    %p162 = scmp.ne.s32.totalorder %s151, %s152
    %p163 = scmp.eq.s32.totalorder %s17, 0
    %p164 = por %p162, %p163
    %p165 = scmp.ne.s32.totalorder %s151, %s152
    %p166 = scmp.eq.s32.totalorder %s18, 1
    %p167 = por %p165, %p166
    %p169 = scmp.ne.s32.totalorder %s152, %s168
    %p170 = scmp.eq.s32.totalorder %s18, 0
    %p171 = por %p169, %p170
    %s172 = ssub.s32 %s19, %s31
    %s173 = ssub.s32 %s20, %s27
    %s174 = sor.u32 %s172, %s173
    %p175 = scmp.eq.s32.totalorder %s174, 0
    %s177 = sadd.s32 %s176, 1
    %s178 = scalar_select %p175, %s176, %s177
    %p181 = pneg %p175
    %p182 = scmp.eq.s32.totalorder %s12, 1
    %p183 = por %p181, %p182
    %p184 = scmp.ne.s32.totalorder %s176, %s179
    %p185 = scmp.eq.s32.totalorder %s12, 0
    %p186 = por %p184, %p185
    %p187 = scmp.ne.s32.totalorder %s176, %s179
    %p188 = scmp.eq.s32.totalorder %s17, 1
    %p189 = por %p187, %p188
    %p190 = scmp.ne.s32.totalorder %s179, %s180
    %p191 = scmp.eq.s32.totalorder %s17, 0
    %p192 = por %p190, %p191
    %p193 = scmp.ne.s32.totalorder %s179, %s180
    %p194 = scmp.eq.s32.totalorder %s18, 1
    %p195 = por %p193, %p194
    %p197 = scmp.ne.s32.totalorder %s180, %s196
    %p198 = scmp.eq.s32.totalorder %s18, 0
    %p199 = por %p197, %p198
    %s201 = sadd.s32 %s200, 1
    %p204 = scmp.eq.s32.totalorder %s12, 1
    %p205 = scmp.ne.s32.totalorder %s200, %s202
    %p206 = scmp.eq.s32.totalorder %s12, 0
    %p207 = por %p205, %p206
    %p208 = scmp.ne.s32.totalorder %s200, %s202
    %p209 = scmp.eq.s32.totalorder %s17, 1
    %p210 = por %p208, %p209
    %p211 = scmp.ne.s32.totalorder %s202, %s203
    %p212 = scmp.eq.s32.totalorder %s17, 0
    %p213 = por %p211, %p212
    %p214 = scmp.ne.s32.totalorder %s202, %s203
    %p215 = scmp.eq.s32.totalorder %s18, 1
    %p216 = por %p214, %p215
    %p218 = scmp.ne.s32.totalorder %s203, %s217
    %p219 = scmp.eq.s32.totalorder %s18, 0
    %p220 = por %p218, %p219
    %p221 = scmp.le.s32.totalorder 1, %s12
    %p222 = scmp.lt.s32.totalorder %s12, 3
    %p223 = pnand %p221, %p222
    %p224 = pneg %p223
    // Predicated region
    $region9: #{loss_func.1} parent=5 // pred_check
      _
    $region10: #{loss_func.1} parent=5 // pred_check_branch
      %226 = sbr.rel (%p223) target = $region12
    $region11: #{loss_func.1} parent=5 // pred_region
      %s227 = ssub.s32 %s12, 1
    $region12: #{loss_func.1} parent=5 // pred_fallthru
      _
    %p228 = scmp.lt.s32.totalorder %s12, 2
    // Predicated region
    $region13: #{loss_func.1} parent=5 // pred_check
      %p229 = pneg %p228
    $region14: #{loss_func.1} parent=5 // pred_check_branch
      %231 = sbr.rel (%p229) target = $region16
    $region15: #{loss_func.1} parent=5 // pred_region
      // Predicated region
      $region17: #{loss_func.1} parent=15 // pred_check
        %p232 = pneg %p46
      $region18: #{loss_func.1} parent=15 // pred_check_branch
        %234 = sbr.rel (%p232) target = $region20
      $region19: #{loss_func.1} parent=15 // pred_region
        %p235 = scmp.lt.s32.totalorder %s19, 1
        %s236 = scalar_select %p235, %s19, 1
        %p237 = scmp.lt.s32.totalorder %s20, 0
        %s238 = scalar_select %p237, %s20, 0
        %s239 = sadd.s32 %s238, %s236
        %s240 = smul.addr %s239, 8
        %s241 = scalar_lea.vmem %s0, %s240
      $region20: #{loss_func.1} parent=15 // pred_fallthru
        _
      // Predicated region
      $region21: #{loss_func.1} parent=15 // pred_check
        %p242 = pneg %p74
      $region22: #{loss_func.1} parent=15 // pred_check_branch
        %244 = sbr.rel (%p242) target = $region24
      $region23: #{loss_func.1} parent=15 // pred_region
        %p245 = scmp.lt.s32.totalorder %s19, 1
        %s246 = scalar_select %p245, %s19, 1
        %p247 = scmp.lt.s32.totalorder %s20, 0
        %s248 = scalar_select %p247, %s20, 0
        %s249 = sadd.s32 %s248, %s246
        %s250 = smul.addr %s249, 8
        %s251 = scalar_lea.vmem %s1, %s250
      $region24: #{loss_func.1} parent=15 // pred_fallthru
        _
      // Predicated region
      $region25: #{loss_func.1} parent=15 // pred_check
        %p252 = pneg %p102
      $region26: #{loss_func.1} parent=15 // pred_check_branch
        %254 = sbr.rel (%p252) target = $region28
      $region27: #{loss_func.1} parent=15 // pred_region
        %p255 = scmp.lt.s32.totalorder %s19, 1
        %s256 = scalar_select %p255, %s19, 1
        %p257 = scmp.lt.s32.totalorder %s20, 0
        %s258 = scalar_select %p257, %s20, 0
        %s259 = sadd.s32 %s258, %s256
        %s260 = smul.addr %s259, 8
        %s261 = scalar_lea.vmem %s2, %s260
      $region28: #{loss_func.1} parent=15 // pred_fallthru
        _
      // Predicated region
      $region29: #{loss_func.1} parent=15 // pred_check
        %p262 = pneg %p130
      $region30: #{loss_func.1} parent=15 // pred_check_branch
        %264 = sbr.rel (%p262) target = $region32
      $region31: #{loss_func.1} parent=15 // pred_region
        %p265 = scmp.lt.s32.totalorder %s19, 1
        %s266 = scalar_select %p265, %s19, 1
        %p267 = scmp.lt.s32.totalorder %s20, 0
        %s268 = scalar_select %p267, %s20, 0
        %s269 = sadd.s32 %s268, %s266
        %s270 = smul.addr %s269, 4
        %s271 = scalar_lea.vmem %s3, %s270
      $region32: #{loss_func.1} parent=15 // pred_fallthru
        _
      // Predicated region
      $region33: #{loss_func.1} parent=15 // pred_check
        %p272 = pneg %p158
      $region34: #{loss_func.1} parent=15 // pred_check_branch
        %274 = sbr.rel (%p272) target = $region36
      $region35: #{loss_func.1} parent=15 // pred_region
        %p275 = scmp.lt.s32.totalorder %s19, 1
        %s276 = scalar_select %p275, %s19, 1
        %p277 = scmp.lt.s32.totalorder %s20, 0
        %s278 = scalar_select %p277, %s20, 0
        %s279 = smul.addr %s276, 5
        %s280 = sadd.s32 %s278, %s279
        %s281 = smul.addr %s280, 8
        %s282 = scalar_lea.vmem %s4, %s281
      $region36: #{loss_func.1} parent=15 // pred_fallthru
        _
      // Predicated region
      $region37: #{loss_func.1} parent=15 // pred_check
        %p283 = pneg %p186
      $region38: #{loss_func.1} parent=15 // pred_check_branch
        %285 = sbr.rel (%p283) target = $region40
      $region39: #{loss_func.1} parent=15 // pred_region
        %p286 = scmp.lt.s32.totalorder %s19, 1
        %s287 = scalar_select %p286, %s19, 1
        %p288 = scmp.lt.s32.totalorder %s20, 0
        %s289 = scalar_select %p288, %s20, 0
        %s290 = smul.addr %s287, 5
        %s291 = sadd.s32 %s289, %s290
        %s292 = smul.addr %s291, 8
        %s293 = scalar_lea.vmem %s5, %s292
      $region40: #{loss_func.1} parent=15 // pred_fallthru
        _
    $region16: #{loss_func.1} parent=5 // pred_fallthru
      _
    %p294 = scmp.le.s32.totalorder 1, %s12
    %p295 = scmp.lt.s32.totalorder %s12, 3
    %p296 = pnand %p294, %p295
    %p297 = pneg %p296
    // Predicated region
    $region41: #{loss_func.1} parent=5 // pred_check
      _
    $region42: #{loss_func.1} parent=5 // pred_check_branch
      %299 = sbr.rel (%p296) target = $region44
    $region43: #{loss_func.1} parent=5 // pred_region
      %s300 = ssub.s32 %s12, 1
      %p301 = scmp.lt.s32.totalorder %s21, 1
      %s302 = scalar_select %p301, %s21, 1
      %p303 = scmp.lt.s32.totalorder %s22, 0
      %s304 = scalar_select %p303, %s22, 0
      %s305 = sadd.s32 %s304, %s302
      %s306 = smul.addr %s305, 8
      %s307 = scalar_lea.vmem %s0, %s306
      %p308 = pneg %p52
      %p309 = pneg %p49
      %p310 = scmp.lt.s32.totalorder %s21, 1
      %s311 = scalar_select %p310, %s21, 1
      %p312 = scmp.lt.s32.totalorder %s22, 0
      %s313 = scalar_select %p312, %s22, 0
      %s314 = sadd.s32 %s313, %s311
      %s315 = smul.addr %s314, 8
      %s316 = scalar_lea.vmem %s1, %s315
      %p317 = pneg %p80
      %p318 = pneg %p77
      %p319 = scmp.lt.s32.totalorder %s21, 1
      %s320 = scalar_select %p319, %s21, 1
      %p321 = scmp.lt.s32.totalorder %s22, 0
      %s322 = scalar_select %p321, %s22, 0
      %s323 = sadd.s32 %s322, %s320
      %s324 = smul.addr %s323, 8
      %s325 = scalar_lea.vmem %s2, %s324
      %p326 = pneg %p108
      %p327 = pneg %p105
      %p328 = scmp.lt.s32.totalorder %s21, 1
      %s329 = scalar_select %p328, %s21, 1
      %p330 = scmp.lt.s32.totalorder %s22, 0
      %s331 = scalar_select %p330, %s22, 0
      %s332 = sadd.s32 %s331, %s329
      %s333 = smul.addr %s332, 4
      %s334 = scalar_lea.vmem %s3, %s333
      %p335 = pneg %p136
      %p336 = pneg %p133
      %p337 = scmp.lt.s32.totalorder %s21, 1
      %s338 = scalar_select %p337, %s21, 1
      %p339 = scmp.lt.s32.totalorder %s22, 0
      %s340 = scalar_select %p339, %s22, 0
      %s341 = smul.addr %s338, 5
      %s342 = sadd.s32 %s340, %s341
      %s343 = smul.addr %s342, 8
      %s344 = scalar_lea.vmem %s4, %s343
      %p345 = pneg %p164
      %p346 = pneg %p161
      %p347 = scmp.lt.s32.totalorder %s21, 1
      %s348 = scalar_select %p347, %s21, 1
      %p349 = scmp.lt.s32.totalorder %s22, 0
      %s350 = scalar_select %p349, %s22, 0
      %s351 = smul.addr %s348, 5
      %s352 = sadd.s32 %s350, %s351
      %s353 = smul.addr %s352, 8
      %s354 = scalar_lea.vmem %s5, %s353
      %p355 = pneg %p192
      %p356 = pneg %p189
      %p357 = pneg %p213
      %p358 = pneg %p210
      %p359 = scmp.lt.s32.totalorder %s21, 1
      %s360 = scalar_select %p359, %s21, 1
      %p361 = scmp.lt.s32.totalorder %s22, 0
      %s362 = scalar_select %p361, %s22, 0
      %s363 = sadd.s32 %s362, %s360
      %s364 = smul.addr %s363, 8
      %s365 = scalar_lea.vmem %s0, %s364
      %p366 = scmp.lt.s32.totalorder %s21, 1
      %s367 = scalar_select %p366, %s21, 1
      %p368 = scmp.lt.s32.totalorder %s22, 0
      %s369 = scalar_select %p368, %s22, 0
      %s370 = sadd.s32 %s369, %s367
      %s371 = smul.addr %s370, 8
      %s372 = scalar_lea.vmem %s1, %s371
      %p373 = scmp.lt.s32.totalorder %s21, 1
      %s374 = scalar_select %p373, %s21, 1
      %p375 = scmp.lt.s32.totalorder %s22, 0
      %s376 = scalar_select %p375, %s22, 0
      %s377 = sadd.s32 %s376, %s374
      %s378 = smul.addr %s377, 8
      %s379 = scalar_lea.vmem %s2, %s378
      %p380 = scmp.lt.s32.totalorder %s21, 1
      %s381 = scalar_select %p380, %s21, 1
      %p382 = scmp.lt.s32.totalorder %s22, 0
      %s383 = scalar_select %p382, %s22, 0
      %s384 = sadd.s32 %s383, %s381
      %s385 = smul.addr %s384, 4
      %s386 = scalar_lea.vmem %s3, %s385
      %p387 = scmp.lt.s32.totalorder %s21, 1
      %s388 = scalar_select %p387, %s21, 1
      %p389 = scmp.lt.s32.totalorder %s22, 0
      %s390 = scalar_select %p389, %s22, 0
      %s391 = smul.addr %s388, 5
      %s392 = sadd.s32 %s390, %s391
      %s393 = smul.addr %s392, 8
      %s394 = scalar_lea.vmem %s4, %s393
      %p395 = scmp.lt.s32.totalorder %s21, 1
      %s396 = scalar_select %p395, %s21, 1
      %p397 = scmp.lt.s32.totalorder %s22, 0
      %s398 = scalar_select %p397, %s22, 0
      %s399 = smul.addr %s396, 5
      %s400 = sadd.s32 %s398, %s399
      %s401 = smul.addr %s400, 8
      %s402 = scalar_lea.vmem %s5, %s401
      %p403 = scmp.eq.s32.totalorder %s21, 0
      %p404 = scmp.eq.s32.totalorder %s22, 0
      %p405 = pnand %p403, %p404
      %p406 = pneg %p405
      // Predicated region
      $region45: #{loss_func.1} parent=43 // pred_check
        _
      $region46: #{loss_func.1} parent=43 // pred_check_branch
        %408 = sbr.rel (%p405) target = $region48
      $region47: #{loss_func.1} parent=43 // pred_region
        %409 = vst [vmem:[#allocation2] sm:$0xff] 0.0
        %410 = vst [vmem:[#allocation2 + $0x8] sm:$0xff] 0.0
        %411 = vst [vmem:[#allocation2 + $0x10] sm:$0xff] 0.0
        %412 = vst [vmem:[#allocation2 + $0x18] sm:$0xff] 0.0
      $region48: #{loss_func.1} parent=43 // pred_fallthru
        _
      %v413 = vld [vmem:[%s365] sm:$0xff]
      %v414 = vld [vmem:[%s372] sm:$0xff]
      %v415 = vld [vmem:[%s379] sm:$0xff]
      %v416 = vld [vmem:[%s386] sm:$0xf]
      %v417 = vunpack.c.l.bf16 %v416
      %v418 = vmul.f32 %v413, %v417
      %v419 = vld [vmem:[#allocation2] sm:$0xff]
      %v420 = vmul.f32 %v418, %v414
      %v421 = vadd.f32 %v420, 0.0
      %v422 = vadd.f32 %v419, %v421
      %423 = vst [vmem:[#allocation2] sm:$0xff] %v422
      %v424 = vld [vmem:[#allocation2 + $0x8] sm:$0xff]
      %v425 = vadd.f32 %v418, 0.0
      %v426 = vadd.f32 %v424, %v425
      %427 = vst [vmem:[#allocation2 + $0x8] sm:$0xff] %v426
      %v428 = vld [vmem:[#allocation2 + $0x10] sm:$0xff]
      %v429 = vmul.f32 %v414, %v417
      %v430 = vadd.f32 %v429, 0.0
      %v431 = vadd.f32 %v428, %v430
      %432 = vst [vmem:[#allocation2 + $0x10] sm:$0xff] %v431
      %v433 = vld [vmem:[%s394] sm:$0xff]
      %s434 = scalar_lea.vmem %s394, 8
      %v435 = vld [vmem:[%s434] sm:$0xff]
      %s436 = scalar_lea.vmem %s394, 16
      %v437 = vld [vmem:[%s436] sm:$0xff]
      %s438 = scalar_lea.vmem %s394, 24
      %v439 = vld [vmem:[%s438] sm:$0xff]
      %s440 = scalar_lea.vmem %s394, 32
      %v441 = vld [vmem:[%s440] sm:$0xff]
      %v442 = vld [vmem:[%s402] sm:$0xff]
      %s443 = scalar_lea.vmem %s402, 8
      %v444 = vld [vmem:[%s443] sm:$0xff]
      %s445 = scalar_lea.vmem %s402, 16
      %v446 = vld [vmem:[%s445] sm:$0xff]
      %s447 = scalar_lea.vmem %s402, 24
      %v448 = vld [vmem:[%s447] sm:$0xff]
      %s449 = scalar_lea.vmem %s402, 32
      %v450 = vld [vmem:[%s449] sm:$0xff]
      %v451 = vadd.f32 %v433, %v437
      %v452 = vadd.f32 %v435, %v439
      %v453 = vmul.f32 %v451, %v452
      %v454 = vadd.f32 %v442, %v446
      %v455 = vadd.f32 %v444, %v448
      %v456 = vmul.f32 %v454, %v455
      %v457 = vmin.f32 %v435, %v444
      %v458 = vmin.f32 %v439, %v448
      %v459 = vadd.f32 %v457, %v458
      %v460 = vmin.f32 %v433, %v442
      %v461 = vmin.f32 %v437, %v446
      %v462 = vadd.f32 %v460, %v461
      %v463 = vmul.f32 %v459, %v462
      %v464 = vadd.f32 %v453, %v456
      %v465 = vsub.f32 %v464, %v463
      %v466 = vadd.f32 %v465, 1.0
      %v467 = vlog2.pop %v466
      %v468 = vmul.f32 %v467, 0.6931472
      %v469 = vadd.f32 %v463, 1.0
      %v470 = vlog2.pop %v469
      %v471 = vmul.f32 %v470, 0.6931472
      %v472 = vsub.f32 %v468, %v471
      %v473 = vsub.f32 %v450, %v441
      %v474 = vand.u32 2147483647, %v473
      %vm475 = vcmp.le.f32.partialorder %v474, 0.7853982
      %vm476 = vcmp.lt.s32.totalorder %v473, 0
      %v477 = vand.u32 %v473, 2139095040
      %v478 = vshrl.u32 %v477, 23
      %v479 = vsub.s32 %v478, 127
      %v480 = vand.u32 2147483647, %v473
      %v481 = vand.u32 %v480, 8388607
      %v482 = vor.u32 %v481, 8388608
      %v483 = vsub.s32 0, %v482
      %v484 = vadd.s32 %v479, 1
      %vm485 = vcmp.gt.s32.totalorder %v484, 0
      %v486 = vsel %vm485, %v484, 0
      %v487 = vshrl.u32 %v486, 5
      %v488 = vand.u32 %v486, 31
      %v489 = vsub.s32 32, %v488
      %v490 = vshrl.u32 683565275, %v489
      %v491 = vshll.u32 683565275, %v488
      %v492 = vshrl.u32 2475754826, %v489
      %v493 = vor.u32 %v491, %v492
      %v494 = vshll.u32 2475754826, %v488
      %v495 = vshrl.u32 2131351028, %v489
      %v496 = vor.u32 %v494, %v495
      %v497 = vshll.u32 2131351028, %v488
      %v498 = vshrl.u32 2102212464, %v489
      %v499 = vor.u32 %v497, %v498
      %v500 = vshll.u32 2102212464, %v488
      %v501 = vshrl.u32 920167782, %v489
      %v502 = vor.u32 %v500, %v501
      %v503 = vshll.u32 920167782, %v488
      %v504 = vshrl.u32 1326507024, %v489
      %v505 = vor.u32 %v503, %v504
      %vm506 = vcmp.lt.s32.totalorder %v487, 1
      %vm507 = vcmp.lt.s32.totalorder %v487, 2
      %vm508 = vcmp.lt.s32.totalorder %v487, 3
      %vm509 = vcmp.lt.s32.totalorder %v487, 4
      %v510 = vsel %vm506, %v490, %v493
      %v511 = vsel %vm509, %v499, 2102212464
      %v512 = vsel %vm508, %v496, %v511
      %v513 = vsel %vm507, %v510, %v512
      %v514 = vsel %vm506, %v493, %v496
      %v515 = vsel %vm509, %v502, 920167782
      %v516 = vsel %vm508, %v499, %v515
      %v517 = vsel %vm507, %v514, %v516
      %v518 = vsel %vm506, %v496, %v499
      %v519 = vsel %vm509, %v505, 1326507024
      %v520 = vsel %vm508, %v502, %v519
      %v521 = vsel %vm507, %v518, %v520
      %v522 = vshll.u32 %v482, 8
      %v523 = vmul.u32.u64.compose %v522, %v521
      %v524 = vextract.low.u32 %v523
      %v525 = vextract.high.u32 %v523
      %v526 = vmul.u32.u64.compose %v522, %v517
      %v527 = vextract.low.u32 %v526
      %v528 = vextract.high.u32 %v526
      %v529 = vmul.u32 %v522, %v513
      %v530 = vadd.s32 %v525, %v527
      %vm531 = vc.u32 %v525, %v527
      %v532 = vadd.s32 %v528, 1
      %v533 = vsel %vm531, %v532, %v528
      %v534 = vadd.s32 %v529, %v533
      %v535 = vadd.s32 %v534, 536870912
      %v536 = vshrl.u32 %v535, 30
      %v537 = vshll.u32 %v536, 30
      %v538 = vsub.s32 %v534, %v537
      %vm539 = vcmp.lt.s32.totalorder %v538, 0
      %v540 = vsub.s32 0, %v538
      %v541 = vsel %vm539, %v540, %v538
      %v542 = vclz %v541
      %v543 = vsub.s32 %v542, 2
      %vm544 = vcmp.gt.s32.totalorder 0, %v543
      %v545 = vsel %vm544, 0, %v543
      %v546 = vsub.s32 32, %v545
      %v547 = vshll.u32 %v538, %v545
      %v548 = vshrl.u32 %v530, %v546
      %v549 = vor.u32 %v547, %v548
      %v550 = vsub.s32 4294967266, %v545
      %v551 = vadd.s32 %v550, 127
      %v552 = vshll.u32 %v551, 23
      %v553 = vor.u32 4788187, %v552
      %v554 = vand.u32 2147483647, %v553
      %v556 = vcvt.s32.f32 %v549
      %v557 = vmul.f32 %v556, %v554
      %v558 = vxor.u32 %v557, 2147483648
      %v559 = vsel %vm476, %v558, %v557
      %v560 = vsub.s32 4, %v536
      %v561 = vsel %vm476, %v560, %v536
      %v562 = vsel %vm475, %v473, %v559
      %v563 = vsel %vm475, 0, %v561
      %v564 = vcosq.f32.pop %v562
      %v565 = vsinq.f32.pop %v562
      %vm566 = vweird.f32 %v473
      %v567 = vand.u32 %v563, 3
      %vm568 = vcmp.lt.s32.totalorder %v567, 2
      %vm569 = vcmp.eq.s32.totalorder %v567, 0
      %v570 = vxor.u32 %v565, 2147483648
      %v571 = vsel %vm569, %v564, %v570
      %vm572 = vcmp.eq.s32.totalorder %v567, 2
      %v573 = vxor.u32 %v564, 2147483648
      %v574 = vsel %vm572, %v573, %v565
      %v575 = vsel %vm568, %v571, %v574
      %v576 = vsel %vm566, nan, %v575
      %v577 = vsub.f32 1.0, %v576
      %v578 = vmul.f32 %v577, 20.0
      %v579 = vadd.f32 %v472, %v578
      %v580 = vld [vmem:[#allocation2 + $0x18] sm:$0xff]
      %v581 = vmul.f32 %v413, %v415
      %v582 = vmul.f32 %v579, %v581
      %v583 = vadd.f32 %v582, 0.0
      %v584 = vadd.f32 %v580, %v583
      %585 = vst [vmem:[#allocation2 + $0x18] sm:$0xff] %v584
      %p586 = scmp.eq.s32.totalorder %s21, 1
      %p587 = pnand %p586, %p404
      %p588 = pneg %p587
      // Predicated region
      $region49: #{loss_func.1} parent=43 // pred_check
        _
      $region50: #{loss_func.1} parent=43 // pred_check_branch
        %590 = sbr.rel (%p587) target = $region52
      $region51: #{loss_func.1} parent=43 // pred_region
        %v591 = vld [vmem:[#allocation2] sm:$0xff]
        %v592 = vld [vmem:[#allocation2 + $0x8] sm:$0xff]
        %v593 = vld [vmem:[#allocation2 + $0x10] sm:$0xff]
        %v594 = vld [vmem:[#allocation2 + $0x18] sm:$0xff]
        %595 = vst [vmem:[%s6] sm:$0xff] %v591
        %596 = vst [vmem:[%s6 + $0x8] sm:$0xff] %v592
        %597 = vst [vmem:[%s6 + $0x10] sm:$0xff] %v593
        %598 = vst [vmem:[%s6 + $0x18] sm:$0xff] %v594
      $region52: #{loss_func.1} parent=43 // pred_fallthru
        _
      // Predicated region
      $region53: #{loss_func.1} parent=43 // pred_check
        %p599 = pneg %p210
      $region54: #{loss_func.1} parent=43 // pred_check_branch
        %601 = sbr.rel (%p599) target = $region56
      $region55: #{loss_func.1} parent=43 // pred_region
        _
      $region56: #{loss_func.1} parent=43 // pred_fallthru
        _
      // Predicated region
      $region57: #{loss_func.1} parent=43 // pred_check
        %p602 = pneg %p210
      $region58: #{loss_func.1} parent=43 // pred_check_branch
        %604 = sbr.rel (%p602) target = $region60
      $region59: #{loss_func.1} parent=43 // pred_region
        _
      $region60: #{loss_func.1} parent=43 // pred_fallthru
        _
    $region44: #{loss_func.1} parent=5 // pred_fallthru
      _
    %p605 = scmp.le.s32.totalorder 2, %s12
    // Predicated region
    $region61: #{loss_func.1} parent=5 // pred_check
      %p606 = pneg %p605
    $region62: #{loss_func.1} parent=5 // pred_check_branch
      %608 = sbr.rel (%p606) target = $region64
    $region63: #{loss_func.1} parent=5 // pred_region
      %s609 = ssub.s32 %s12, 2
    $region64: #{loss_func.1} parent=5 // pred_fallthru
      _
  $region6: #{loss_func.1} parent=0 // loop_footer
    %s16 = sadd.s32 1, %s12
  $region7: #{loss_func.1} parent=0 // loop_footer_branch
    %11 = sbr.rel target = $region3
  $region8: #{loss_func.1} parent=0 // loop_exit
    _

</llo_original>
